<compile_context>
chip_gen: v6e
topology: v6e:2x2x1
jax: 0.10.0
libtpu: 0.0.40
codegen_flags: <defaults>
</compile_context>

<pallas_src>
import numpy as np
import jax
import jax.numpy as jnp
from jax.experimental import pallas as pl
from jax.experimental.pallas import tpu as pltpu


# ---------------------------------------------------------------------------
# Kernel
# ---------------------------------------------------------------------------
def hybrid_head_kernel(h_ref, w_ref, b_ref, a_ref, bm_ref, eps_ref, pthr_ref, out_ref):
    # Fused projection for all five heads: bf16 MXU inputs, f32 accumulation.
    y = jnp.dot(h_ref[...], w_ref[...],
                preferred_element_type=jnp.float32) + b_ref[...]          # [bt, N] f32

    # Factored norm computation (f32 norm path, per review):
    #   r_small[:, k] = sum of y^2 over the lanes belonging to denominator k
    #   r[:, n]       = squared norm that applies to lane n (0 for passthrough lanes)
    y2 = y * y
    r_small = jnp.dot(y2, a_ref[...], preferred_element_type=jnp.float32)   # [bt, K]
    r = jnp.dot(r_small, bm_ref[...], preferred_element_type=jnp.float32)   # [bt, N]

    # eps is per-lane: 1.0 for hyperbolic (denom = 1 + ||x||), 1e-8 for
    # projective / dq-real (denom = ||x|| + 1e-8), 1.0 (irrelevant) elsewhere.
    denom = jnp.sqrt(r) + eps_ref[...]

    # Approximate reciprocal runs on the otherwise-idle EUP slot; passthrough
    # lanes (euclidean, dq-dual) get an exact 1.0 via the VPU select.
    inv = jnp.where(pthr_ref[...] > 0.5, 1.0, pl.reciprocal(denom, approx=True))

    # Single lane-dense full-width store (out dtype f32; switch out_shape to
    # bf16 if downstream tolerates it — helps v5e's lower HBM bandwidth).
    out_ref[...] = (y * inv).astype(out_ref.dtype)


# ---------------------------------------------------------------------------
# Host-side parameter fusion / constants
# ---------------------------------------------------------------------------
def build_norm_constants(O, Oh):
    """Factored reduction matrices A [N,K], Bm [K,N] plus per-lane eps / passthrough."""
    N = 3 * O + 2 * Oh                     # == 4*O
    n_grp = Oh // 4                        # quaternion groups in the dq-real head
    K_used = 2 + n_grp                     # hyp, prj, one per quaternion group
    K = max(128, ((K_used + 127) // 128) * 128)   # pad to a full 128-lane vreg

    A = np.zeros((N, K), np.float32)       # gather: lanes -> denominator columns
    A[O:2 * O, 0] = 1.0                    # hyperbolic: full-vector squared norm
    A[2 * O:3 * O, 1] = 1.0                # projective: full-vector squared norm
    for g in range(n_grp):                 # dq-real: per-quaternion squared norm
        A[3 * O + 4 * g:3 * O + 4 * (g + 1), 2 + g] = 1.0

    Bm = np.zeros((K, N), np.float32)      # scatter: denominator columns -> lanes
    Bm[0, O:2 * O] = 1.0
    Bm[1, 2 * O:3 * O] = 1.0
    for g in range(n_grp):
        Bm[2 + g, 3 * O + 4 * g:3 * O + 4 * (g + 1)] = 1.0

    eps = np.ones((1, N), np.float32)      # hyperbolic: denom = 1 + ||x||
    eps[0, 2 * O:3 * O] = 1e-8             # projective: ||x|| + 1e-8
    eps[0, 3 * O:3 * O + Oh] = 1e-8        # dq-real:    group-norm + 1e-8

    pthr = np.zeros((1, N), np.float32)    # exact-passthrough lanes (inv == 1.0)
    pthr[0, :O] = 1.0                      # euclidean
    pthr[0, 3 * O + Oh:] = 1.0             # dq-dual

    return jnp.asarray(A), jnp.asarray(Bm), jnp.asarray(eps), jnp.asarray(pthr)


def fuse_params(p, *, mxu_dtype=jnp.bfloat16):
    """Concatenate the five heads into one [H, 4*O] weight / [1, 4*O] bias."""
    O = p["we"].shape[1]
    Oh = p["wr"].shape[1]
    w_all = jnp.concatenate([p["we"], p["wh"], p["wp"], p["wr"], p["wd"]],
                            axis=1).astype(mxu_dtype)           # bf16 MXU inputs
    b_all = jnp.concatenate([p["be"], p["bh"], p["bp"], p["br"], p["bd"]],
                            axis=1).astype(jnp.float32)         # bias stays f32
    A, Bm, eps, pthr = build_norm_constants(O, Oh)
    return {"w_all": w_all, "b_all": b_all, "A": A, "Bm": Bm,
            "eps": eps, "pthr": pthr, "output_dim": O}


# ---------------------------------------------------------------------------
# Wrapper
# ---------------------------------------------------------------------------
def _pick_batch_tile(Bp, max_rows=512):
    """Fill the MXU M-dim: single tile up to max_rows; else the largest
    16-row-aligned divisor, preferring an EVEN step count (v7x has 2 TCs)."""
    assert Bp % 16 == 0
    if Bp <= max_rows:
        return Bp
    best = 16
    for t in range(max_rows - (max_rows % 16), 15, -16):
        if Bp % t == 0:
            if (Bp // t) % 2 == 0:
                return t
            best = max(best, t)
    return best


def hybrid_head(hidden, fused, *, bt=None):
    """Run the fused HybridHead Pallas kernel.  hidden: [B, H] float32."""
    B, H = hidden.shape
    O = fused["output_dim"]
    w_all = fused["w_all"]
    N = w_all.shape[1]                      # == 4*O
    K = fused["A"].shape[1]

    # Pad batch to a multiple of 16 (bf16 sublane packing) and cast the MXU
    # input to the weight dtype host-side (halves the hidden-tile HBM traffic).
    Bp = ((B + 15) // 16) * 16
    h = hidden if Bp == B else jnp.pad(hidden, ((0, Bp - B), (0, 0)))
    h = h.astype(w_all.dtype)

    if bt is None:
        bt = _pick_batch_tile(Bp)
    assert Bp % bt == 0 and bt % 16 == 0
    steps = Bp // bt

    batch_spec = pl.BlockSpec((bt, H), lambda i: (i, 0))
    out_spec = pl.BlockSpec((bt, N), lambda i: (i, 0))

    # Advisory cost estimate so XLA schedules the embedding gather / output
    # slices around the custom call sensibly.
    const_bytes = H * N * w_all.dtype.itemsize + (N * K + K * N + 3 * N) * 4
    cost = pl.CostEstimate(
        flops=2 * Bp * N * (H + 2 * K) + 6 * Bp * N,
        transcendentals=2 * Bp * N,                         # sqrt + reciprocal
        bytes_accessed=Bp * H * h.dtype.itemsize + const_bytes + Bp * N * 4)

    def compiler_params(n_const_buf):
        kw = dict(dimension_semantics=("parallel",))
        # Only raise the scoped-VMEM limit when large tiles actually need it
        # (v5e default is 16 MiB); cap below v7x's 64 MiB physical VMEM.
        need = 2 * bt * (H * h.dtype.itemsize + N * 4) + n_const_buf * const_bytes
        if need > 14 * (1 << 20):
            kw["vmem_limit_bytes"] = min(int(need * 1.5) + (2 << 20), 48 * (1 << 20))
        return pltpu.CompilerParams(**kw)

    def build(single_buffer_consts):
        # Constant block index -> weights/bias/A/Bm/eps/pthr stay VMEM-resident
        # across batch tiles (no re-DMA).  Buffered(1) drops their second
        # (never-used) pipeline buffer.
        if single_buffer_consts:
            const = lambda shape: pl.BlockSpec(shape, lambda i: (0, 0),
                                               pipeline_mode=pl.Buffered(1))
        else:
            const = lambda shape: pl.BlockSpec(shape, lambda i: (0, 0))
        return pl.pallas_call(
            hybrid_head_kernel,
            grid=(steps,),
            in_specs=[
                batch_spec,                  # hidden tile (bf16)
                const((H, N)),               # fused weights (bf16)
                const((1, N)),               # fused bias (f32)
                const((N, K)),               # norm gather matrix A (f32)
                const((K, N)),               # norm scatter matrix Bm (f32)
                const((1, N)),               # per-lane epsilon
                const((1, N)),               # per-lane passthrough mask
            ],
            out_specs=out_spec,
            out_shape=jax.ShapeDtypeStruct((Bp, N), jnp.float32),
            compiler_params=compiler_params(1 if single_buffer_consts else 2),
            cost_estimate=cost,
        )

    args = (h, w_all, fused["b_all"], fused["A"], fused["Bm"],
            fused["eps"], fused["pthr"])
    try:
        slab = build(True)(*args)
    except Exception:
        # pipeline_mode=pl.Buffered(1) unsupported on this jax/libtpu:
        # fall back to default double-buffered constants (correctness identical).
        slab = build(False)(*args)

    if Bp != B:
        slab = slab[:B]

    # Cheap host-side lane slices back into the per-head dict.
    return {
        "euclidean": slab[:, :O],
        "hyperbolic": slab[:, O:2 * O],
        "projective": slab[:, 2 * O:3 * O],
        "dual_quaternion": slab[:, 3 * O:4 * O],   # [real_n | dual] already packed
    }


# ---------------------------------------------------------------------------
# Plain-JAX reference (mirrors the PyTorch HybridHead forward)
# ---------------------------------------------------------------------------
def hybrid_head_ref(hidden, p):
    h = hidden
    euc = h @ p["we"] + p["be"][0]

    hp = h @ p["wh"] + p["bh"][0]
    hyp = hp / (1.0 + jnp.linalg.norm(hp, axis=-1, keepdims=True))

    pj = h @ p["wp"] + p["bp"][0]
    prj = pj / (jnp.linalg.norm(pj, axis=-1, keepdims=True) + 1e-8)

    real = h @ p["wr"] + p["br"][0]
    dual = h @ p["wd"] + p["bd"][0]
    B, Oh = real.shape
    r = real.reshape(B, Oh // 4, 4)
    rn = jnp.linalg.norm(r, axis=-1, keepdims=True)
    real_n = (r / (rn + 1e-8)).reshape(B, Oh)
    dq = jnp.concatenate([real_n, dual], axis=-1)
    return {"euclidean": euc, "hyperbolic": hyp,
            "projective": prj, "dual_quaternion": dq}


def init_params(key, hidden_dim, output_dim):
    assert output_dim % 8 == 0
    ks = jax.random.split(key, 10)
    s = 1.0 / jnp.sqrt(hidden_dim)
    def w(k, o): return (jax.random.uniform(k, (hidden_dim, o), jnp.float32) * 2 - 1) * s
    def b(k, o): return (jax.random.uniform(k, (1, o), jnp.float32) * 2 - 1) * s
    O, Oh = output_dim, output_dim // 2
    return {
        "we": w(ks[0], O),  "be": b(ks[1], O),
        "wh": w(ks[2], O),  "bh": b(ks[3], O),
        "wp": w(ks[4], O),  "bp": b(ks[5], O),
        "wr": w(ks[6], Oh), "br": b(ks[7], Oh),
        "wd": w(ks[8], Oh), "bd": b(ks[9], Oh),
    }


def tars_custom_transformer_forward(input_ids, attention_mask, emb_table, fused_head):
    # TODO(synk): the pretrained HF backbone (AutoModel MiniLM) has no Pallas
    # equivalent; a deterministic token-embedding lookup at the CLS position
    # (index 0) stands in for `last_hidden_state[:, 0]`.
    hidden = emb_table[input_ids[:, 0]]            # [B, H]  (CLS-position hidden)
    # nn.Dropout(0.1) is identity in eval mode.
    return hybrid_head(hidden, fused_head)


if __name__ == "__main__":
    B, S, H, O, VOCAB = 16, 8, 32, 32, 100

    key = jax.random.PRNGKey(0)
    k_ids, k_emb, k_head = jax.random.split(key, 3)

    input_ids = jax.random.randint(k_ids, (B, S), 0, VOCAB, dtype=jnp.int32)
    attention_mask = jnp.ones((B, S), dtype=jnp.int32)
    emb_table = jax.random.normal(k_emb, (VOCAB, H), jnp.float32) * 0.1
    head_params = init_params(k_head, H, O)
    fused_head = fuse_params(head_params)

    out = tars_custom_transformer_forward(input_ids, attention_mask,
                                          emb_table, fused_head)
    out = jax.tree_util.tree_map(jax.block_until_ready, out)

    hidden = emb_table[input_ids[:, 0]]
    # (a) tight check vs a reference quantized exactly like the kernel's MXU
    #     inputs (bf16 weights/hidden, f32 accumulation) — isolates kernel math;
    #     residual error is only the EUP approximate reciprocal on divided lanes
    #     (euclidean / dq-dual lanes are exact passthroughs now).
    p_bf = {k: (v.astype(jnp.bfloat16).astype(jnp.float32) if k.startswith("w") else v)
            for k, v in head_params.items()}
    ref_bf = hybrid_head_ref(hidden.astype(jnp.bfloat16).astype(jnp.float32), p_bf)
    # (b) loose check vs the full-f32 PyTorch-equivalent reference — documents
    #     the bf16 MXU-input quantization adopted for v5e/v6e/v7x throughput.
    ref_f32 = hybrid_head_ref(hidden, head_params)

    for name in ("euclidean", "hyperbolic", "projective", "dual_quaternion"):
        assert out[name].shape == (B, O), (name, out[name].shape)
        assert jnp.allclose(out[name], ref_bf[name], atol=2e-3, rtol=5e-3), name
        assert jnp.allclose(out[name], ref_f32[name], atol=3e-2, rtol=5e-2), name

    print("KERNEL_OK")
</pallas_src>

<mosaic_0001>
module attributes {stable_mosaic.version = 11 : i64} {
  func.func @hybrid_head_kernel(%arg0: i32, %arg1: memref<16x32xbf16, #tpu.memory_space<vmem>>, %arg2: memref<32x128xbf16, #tpu.memory_space<vmem>>, %arg3: memref<1x128xf32, #tpu.memory_space<vmem>>, %arg4: memref<128x128xf32, #tpu.memory_space<vmem>>, %arg5: memref<128x128xf32, #tpu.memory_space<vmem>>, %arg6: memref<1x128xf32, #tpu.memory_space<vmem>>, %arg7: memref<1x128xf32, #tpu.memory_space<vmem>>, %arg8: memref<16x128xf32, #tpu.memory_space<vmem>>) attributes {dimension_semantics = [#tpu.dimension_semantics<parallel>], iteration_bounds = array<i64: 1>, scalar_prefetch = 0 : i64, scratch_operands = 0 : i64, tpu.core_type = #tpu.core_type<tc>, window_params = [{transform_indices = @transform_0, window_bounds = array<i64: 16, 32>}, {pipeline_mode = #tpu.pipeline_mode<synchronous>, transform_indices = @transform_1, window_bounds = array<i64: 32, 128>}, {pipeline_mode = #tpu.pipeline_mode<synchronous>, transform_indices = @transform_2, window_bounds = array<i64: 1, 128>}, {pipeline_mode = #tpu.pipeline_mode<synchronous>, transform_indices = @transform_3, window_bounds = array<i64: 128, 128>}, {pipeline_mode = #tpu.pipeline_mode<synchronous>, transform_indices = @transform_4, window_bounds = array<i64: 128, 128>}, {pipeline_mode = #tpu.pipeline_mode<synchronous>, transform_indices = @transform_5, window_bounds = array<i64: 1, 128>}, {pipeline_mode = #tpu.pipeline_mode<synchronous>, transform_indices = @transform_6, window_bounds = array<i64: 1, 128>}, {transform_indices = @transform_7, window_bounds = array<i64: 16, 128>}]} {
    %c0 = arith.constant 0 : index
    %c0_0 = arith.constant 0 : index
    %0 = vector.load %arg1[%c0, %c0_0] : memref<16x32xbf16, #tpu.memory_space<vmem>>, vector<16x32xbf16>
    %c0_1 = arith.constant 0 : index
    %c0_2 = arith.constant 0 : index
    %1 = vector.load %arg2[%c0_1, %c0_2] : memref<32x128xbf16, #tpu.memory_space<vmem>>, vector<32x128xbf16>
    %cst = arith.constant dense<0.000000e+00> : vector<16x128xf32>
    %2 = tpu.matmul %0, %1, %cst {dimension_numbers = #tpu.dot_dimension_numbers<[1], [0], [0], [1], [0, 0, 1, 1], [], []>} : vector<16x32xbf16>, vector<32x128xbf16>, vector<16x128xf32> -> vector<16x128xf32>
    %c0_3 = arith.constant 0 : index
    %c0_4 = arith.constant 0 : index
    %3 = vector.load %arg3[%c0_3, %c0_4] : memref<1x128xf32, #tpu.memory_space<vmem>>, vector<1x128xf32>
    %4 = vector.broadcast %3 : vector<1x128xf32> to vector<16x128xf32>
    %5 = arith.addf %2, %4 : vector<16x128xf32>
    %6 = arith.mulf %5, %5 : vector<16x128xf32>
    %c0_5 = arith.constant 0 : index
    %c0_6 = arith.constant 0 : index
    %7 = vector.load %arg4[%c0_5, %c0_6] : memref<128x128xf32, #tpu.memory_space<vmem>>, vector<128x128xf32>
    %cst_7 = arith.constant dense<0.000000e+00> : vector<16x128xf32>
    %8 = tpu.matmul %6, %7, %cst_7 {dimension_numbers = #tpu.dot_dimension_numbers<[1], [0], [0], [1], [0, 0, 1, 1], [], []>} : vector<16x128xf32>, vector<128x128xf32>, vector<16x128xf32> -> vector<16x128xf32>
    %c0_8 = arith.constant 0 : index
    %c0_9 = arith.constant 0 : index
    %9 = vector.load %arg5[%c0_8, %c0_9] : memref<128x128xf32, #tpu.memory_space<vmem>>, vector<128x128xf32>
    %cst_10 = arith.constant dense<0.000000e+00> : vector<16x128xf32>
    %10 = tpu.matmul %8, %9, %cst_10 {dimension_numbers = #tpu.dot_dimension_numbers<[1], [0], [0], [1], [0, 0, 1, 1], [], []>} : vector<16x128xf32>, vector<128x128xf32>, vector<16x128xf32> -> vector<16x128xf32>
    %11 = math.sqrt %10 : vector<16x128xf32>
    %c0_11 = arith.constant 0 : index
    %c0_12 = arith.constant 0 : index
    %12 = vector.load %arg6[%c0_11, %c0_12] : memref<1x128xf32, #tpu.memory_space<vmem>>, vector<1x128xf32>
    %13 = vector.broadcast %12 : vector<1x128xf32> to vector<16x128xf32>
    %14 = arith.addf %11, %13 : vector<16x128xf32>
    %c0_13 = arith.constant 0 : index
    %c0_14 = arith.constant 0 : index
    %15 = vector.load %arg7[%c0_13, %c0_14] : memref<1x128xf32, #tpu.memory_space<vmem>>, vector<1x128xf32>
    %cst_15 = arith.constant 5.000000e-01 : f32
    %16 = vector.broadcast %cst_15 : f32 to vector<1x128xf32>
    %17 = arith.cmpf ogt, %15, %16 : vector<1x128xf32>
    %18 = tpu.reciprocal %14 {approx = true} : vector<16x128xf32> -> vector<16x128xf32>
    %cst_16 = arith.constant 1.000000e+00 : f32
    %19 = vector.shape_cast %17 : vector<1x128xi1> to vector<1x128xi1>
    %20 = vector.broadcast %19 : vector<1x128xi1> to vector<16x128xi1>
    %21 = vector.broadcast %cst_16 : f32 to vector<16x128xf32>
    %22 = arith.select %20, %21, %18 : vector<16x128xi1>, vector<16x128xf32>
    %23 = arith.mulf %5, %22 : vector<16x128xf32>
    %c0_17 = arith.constant 0 : index
    %c0_18 = arith.constant 0 : index
    %24 = vector.load %arg8[%c0_17, %c0_18] : memref<16x128xf32, #tpu.memory_space<vmem>>, vector<16x128xf32>
    tpu.vector_store %arg8[%c0_17, %c0_18], %23 {strides = array<i32>} : memref<16x128xf32, #tpu.memory_space<vmem>>, vector<16x128xf32>,
    return
  }
  func.func @transform_0(%arg0: i32) -> (i32, i32) {
    %c0_i32 = arith.constant 0 : i32
    %c0_i32_0 = arith.constant 0 : i32
    return %arg0, %c0_i32 : i32, i32
  }
  func.func @transform_1(%arg0: i32) -> (i32, i32) {
    %c0_i32 = arith.constant 0 : i32
    %c0_i32_0 = arith.constant 0 : i32
    %c0_i32_1 = arith.constant 0 : i32
    return %c0_i32, %c0_i32_0 : i32, i32
  }
  func.func @transform_2(%arg0: i32) -> (i32, i32) {
    %c0_i32 = arith.constant 0 : i32
    %c0_i32_0 = arith.constant 0 : i32
    %c0_i32_1 = arith.constant 0 : i32
    return %c0_i32, %c0_i32_0 : i32, i32
  }
  func.func @transform_3(%arg0: i32) -> (i32, i32) {
    %c0_i32 = arith.constant 0 : i32
    %c0_i32_0 = arith.constant 0 : i32
    %c0_i32_1 = arith.constant 0 : i32
    return %c0_i32, %c0_i32_0 : i32, i32
  }
  func.func @transform_4(%arg0: i32) -> (i32, i32) {
    %c0_i32 = arith.constant 0 : i32
    %c0_i32_0 = arith.constant 0 : i32
    %c0_i32_1 = arith.constant 0 : i32
    return %c0_i32, %c0_i32_0 : i32, i32
  }
  func.func @transform_5(%arg0: i32) -> (i32, i32) {
    %c0_i32 = arith.constant 0 : i32
    %c0_i32_0 = arith.constant 0 : i32
    %c0_i32_1 = arith.constant 0 : i32
    return %c0_i32, %c0_i32_0 : i32, i32
  }
  func.func @transform_6(%arg0: i32) -> (i32, i32) {
    %c0_i32 = arith.constant 0 : i32
    %c0_i32_0 = arith.constant 0 : i32
    %c0_i32_1 = arith.constant 0 : i32
    return %c0_i32, %c0_i32_0 : i32, i32
  }
  func.func @transform_7(%arg0: i32) -> (i32, i32) {
    %c0_i32 = arith.constant 0 : i32
    %c0_i32_0 = arith.constant 0 : i32
    return %arg0, %c0_i32 : i32, i32
  }
}

module attributes {stable_mosaic.version = 11 : i64} {
  func.func @hybrid_head_kernel(%arg0: i32, %arg1: memref<16x32xbf16, #tpu.memory_space<vmem>>, %arg2: memref<32x128xbf16, #tpu.memory_space<vmem>>, %arg3: memref<1x128xf32, #tpu.memory_space<vmem>>, %arg4: memref<128x128xf32, #tpu.memory_space<vmem>>, %arg5: memref<128x128xf32, #tpu.memory_space<vmem>>, %arg6: memref<1x128xf32, #tpu.memory_space<vmem>>, %arg7: memref<1x128xf32, #tpu.memory_space<vmem>>, %arg8: memref<16x128xf32, #tpu.memory_space<vmem>>) attributes {dimension_semantics = [#tpu.dimension_semantics<parallel>], iteration_bounds = array<i64: 1>, scalar_prefetch = 0 : i64, scratch_operands = 0 : i64, tpu.core_type = #tpu.core_type<tc>, window_params = [{transform_indices = @transform_0, window_bounds = array<i64: 16, 32>}, {pipeline_mode = #tpu.pipeline_mode<synchronous>, transform_indices = @transform_1, window_bounds = array<i64: 32, 128>}, {pipeline_mode = #tpu.pipeline_mode<synchronous>, transform_indices = @transform_2, window_bounds = array<i64: 1, 128>}, {pipeline_mode = #tpu.pipeline_mode<synchronous>, transform_indices = @transform_3, window_bounds = array<i64: 128, 128>}, {pipeline_mode = #tpu.pipeline_mode<synchronous>, transform_indices = @transform_4, window_bounds = array<i64: 128, 128>}, {pipeline_mode = #tpu.pipeline_mode<synchronous>, transform_indices = @transform_5, window_bounds = array<i64: 1, 128>}, {pipeline_mode = #tpu.pipeline_mode<synchronous>, transform_indices = @transform_6, window_bounds = array<i64: 1, 128>}, {transform_indices = @transform_7, window_bounds = array<i64: 16, 128>}]} {
    %c0 = arith.constant 0 : index
    %c0_0 = arith.constant 0 : index
    %0 = vector.load %arg1[%c0, %c0_0] : memref<16x32xbf16, #tpu.memory_space<vmem>>, vector<16x32xbf16>
    %c0_1 = arith.constant 0 : index
    %c0_2 = arith.constant 0 : index
    %1 = vector.load %arg2[%c0_1, %c0_2] : memref<32x128xbf16, #tpu.memory_space<vmem>>, vector<32x128xbf16>
    %cst = arith.constant dense<0.000000e+00> : vector<16x128xf32>
    %2 = tpu.matmul %0, %1, %cst {dimension_numbers = #tpu.dot_dimension_numbers<[1], [0], [0], [1], [0, 0, 1, 1], [], []>} : vector<16x32xbf16>, vector<32x128xbf16>, vector<16x128xf32> -> vector<16x128xf32>
    %c0_3 = arith.constant 0 : index
    %c0_4 = arith.constant 0 : index
    %3 = vector.load %arg3[%c0_3, %c0_4] : memref<1x128xf32, #tpu.memory_space<vmem>>, vector<1x128xf32>
    %4 = vector.broadcast %3 : vector<1x128xf32> to vector<16x128xf32>
    %5 = arith.addf %2, %4 : vector<16x128xf32>
    %6 = arith.mulf %5, %5 : vector<16x128xf32>
    %c0_5 = arith.constant 0 : index
    %c0_6 = arith.constant 0 : index
    %7 = vector.load %arg4[%c0_5, %c0_6] : memref<128x128xf32, #tpu.memory_space<vmem>>, vector<128x128xf32>
    %cst_7 = arith.constant dense<0.000000e+00> : vector<16x128xf32>
    %8 = tpu.matmul %6, %7, %cst_7 {dimension_numbers = #tpu.dot_dimension_numbers<[1], [0], [0], [1], [0, 0, 1, 1], [], []>} : vector<16x128xf32>, vector<128x128xf32>, vector<16x128xf32> -> vector<16x128xf32>
    %c0_8 = arith.constant 0 : index
    %c0_9 = arith.constant 0 : index
    %9 = vector.load %arg5[%c0_8, %c0_9] : memref<128x128xf32, #tpu.memory_space<vmem>>, vector<128x128xf32>
    %cst_10 = arith.constant dense<0.000000e+00> : vector<16x128xf32>
    %10 = tpu.matmul %8, %9, %cst_10 {dimension_numbers = #tpu.dot_dimension_numbers<[1], [0], [0], [1], [0, 0, 1, 1], [], []>} : vector<16x128xf32>, vector<128x128xf32>, vector<16x128xf32> -> vector<16x128xf32>
    %11 = math.sqrt %10 : vector<16x128xf32>
    %c0_11 = arith.constant 0 : index
    %c0_12 = arith.constant 0 : index
    %12 = vector.load %arg6[%c0_11, %c0_12] : memref<1x128xf32, #tpu.memory_space<vmem>>, vector<1x128xf32>
    %13 = vector.broadcast %12 : vector<1x128xf32> to vector<16x128xf32>
    %14 = arith.addf %11, %13 : vector<16x128xf32>
    %c0_13 = arith.constant 0 : index
    %c0_14 = arith.constant 0 : index
    %15 = vector.load %arg7[%c0_13, %c0_14] : memref<1x128xf32, #tpu.memory_space<vmem>>, vector<1x128xf32>
    %cst_15 = arith.constant 5.000000e-01 : f32
    %16 = vector.broadcast %cst_15 : f32 to vector<1x128xf32>
    %17 = arith.cmpf ogt, %15, %16 : vector<1x128xf32>
    %18 = tpu.reciprocal %14 {approx = true} : vector<16x128xf32> -> vector<16x128xf32>
    %cst_16 = arith.constant 1.000000e+00 : f32
    %19 = vector.shape_cast %17 : vector<1x128xi1> to vector<1x128xi1>
    %20 = vector.broadcast %19 : vector<1x128xi1> to vector<16x128xi1>
    %21 = vector.broadcast %cst_16 : f32 to vector<16x128xf32>
    %22 = arith.select %20, %21, %18 : vector<16x128xi1>, vector<16x128xf32>
    %23 = arith.mulf %5, %22 : vector<16x128xf32>
    %c0_17 = arith.constant 0 : index
    %c0_18 = arith.constant 0 : index
    %24 = vector.load %arg8[%c0_17, %c0_18] : memref<16x128xf32, #tpu.memory_space<vmem>>, vector<16x128xf32>
    tpu.vector_store %arg8[%c0_17, %c0_18], %23 {strides = array<i32>} : memref<16x128xf32, #tpu.memory_space<vmem>>, vector<16x128xf32>,
    return
  }
  func.func @transform_0(%arg0: i32) -> (i32, i32) {
    %c0_i32 = arith.constant 0 : i32
    %c0_i32_0 = arith.constant 0 : i32
    return %arg0, %c0_i32 : i32, i32
  }
  func.func @transform_1(%arg0: i32) -> (i32, i32) {
    %c0_i32 = arith.constant 0 : i32
    %c0_i32_0 = arith.constant 0 : i32
    %c0_i32_1 = arith.constant 0 : i32
    return %c0_i32, %c0_i32_0 : i32, i32
  }
  func.func @transform_2(%arg0: i32) -> (i32, i32) {
    %c0_i32 = arith.constant 0 : i32
    %c0_i32_0 = arith.constant 0 : i32
    %c0_i32_1 = arith.constant 0 : i32
    return %c0_i32, %c0_i32_0 : i32, i32
  }
  func.func @transform_3(%arg0: i32) -> (i32, i32) {
    %c0_i32 = arith.constant 0 : i32
    %c0_i32_0 = arith.constant 0 : i32
    %c0_i32_1 = arith.constant 0 : i32
    return %c0_i32, %c0_i32_0 : i32, i32
  }
  func.func @transform_4(%arg0: i32) -> (i32, i32) {
    %c0_i32 = arith.constant 0 : i32
    %c0_i32_0 = arith.constant 0 : i32
    %c0_i32_1 = arith.constant 0 : i32
    return %c0_i32, %c0_i32_0 : i32, i32
  }
  func.func @transform_5(%arg0: i32) -> (i32, i32) {
    %c0_i32 = arith.constant 0 : i32
    %c0_i32_0 = arith.constant 0 : i32
    %c0_i32_1 = arith.constant 0 : i32
    return %c0_i32, %c0_i32_0 : i32, i32
  }
  func.func @transform_6(%arg0: i32) -> (i32, i32) {
    %c0_i32 = arith.constant 0 : i32
    %c0_i32_0 = arith.constant 0 : i32
    %c0_i32_1 = arith.constant 0 : i32
    return %c0_i32, %c0_i32_0 : i32, i32
  }
  func.func @transform_7(%arg0: i32) -> (i32, i32) {
    %c0_i32 = arith.constant 0 : i32
    %c0_i32_0 = arith.constant 0 : i32
    return %arg0, %c0_i32 : i32, i32
  }
}

</mosaic_0001>

<llo_original>
// kernel: tpu_custom_call.1
$region0: #{tpu_custom_call.1}
  #allocation0 [shape = 'u32[]', space=smem, size = 0x4, offset = 0x4, fixed_abs, tag = 'smem constant byte address 0x4 - core index']
  #allocation1 [shape = 'u32[144,128]{1,0:T(1,128)}', space=vmem, size = 0x12000, scoped, tag = 'internal scratch']
  %s0 = inlined_call_operand.hbm [shape: bf16[16,32], index: 0, kind: input, shape index: {}]
  %s1 = inlined_call_operand.hbm [shape: bf16[32,128], index: 1, kind: input, shape index: {}]
  %s2 = inlined_call_operand.vmem [shape: f32[1,128], index: 2, kind: input, shape index: {}]
  %s3 = inlined_call_operand.hbm [shape: f32[128,128], index: 3, kind: input, shape index: {}]
  %s4 = inlined_call_operand.hbm [shape: f32[128,128], index: 4, kind: input, shape index: {}]
  %s5 = inlined_call_operand.vmem [shape: f32[1,128], index: 5, kind: input, shape index: {}]
  %s6 = inlined_call_operand.vmem [shape: f32[1,128], index: 6, kind: input, shape index: {}]
  %s7 = inlined_call_operand.hbm [shape: f32[16,128], index: 7, kind: output, shape index: {}]
  %s8 = sld [smem:[#allocation0]]
  $region54: #{tpu_custom_call.1} parent=0
    _
  %s10 = ssub.s32 1, %s8
  %s11 = scalar_select 0, %s10, %s8
  $region1: #{tpu_custom_call.1} parent=0
    #allocation2 [shape = 'u8[4096]{0}', space=vmem, size = 0x1000, scoped, tag = 'input window, operand 0, single buffered']
    #allocation3 [shape = 's32[1]{0}', space=sflag, size = 0x4, scoped, tag = 'scoped memory for tpu_custom_call.1']
    #allocation4 [shape = 's32[1]{0}', space=sflag, size = 0x4, scoped, tag = 'scoped memory for tpu_custom_call.1']
    #allocation5 [shape = 'u8[8192]{0}', space=vmem, size = 0x2000, scoped, tag = 'input window, operand 1, single buffered']
    #allocation6 [shape = 's32[1]{0}', space=sflag, size = 0x4, scoped, tag = 'scoped memory for tpu_custom_call.1']
    #allocation7 [shape = 'u8[65536]{0}', space=vmem, size = 0x10000, scoped, tag = 'input window, operand 3, single buffered']
    #allocation8 [shape = 'u8[65536]{0}', space=vmem, size = 0x10000, scoped, tag = 'input window, operand 4, single buffered']
    #allocation9 [shape = 's32[1]{0}', space=sflag, size = 0x4, scoped, tag = 'scoped memory for tpu_custom_call.1']
    #allocation10 [shape = 'u8[8192]{0}', space=vmem, size = 0x2000, scoped, tag = 'output window, operand 0, single buffered']
    %12 = vsyncpa [#allocation3], 0
    %13 = vsyncpa [#allocation6], 0
    %14 = vsyncpa [#allocation9], 0
    %15 = vsyncpa [#allocation4], 0
    // Predicated region
    $region2: #{tpu_custom_call.1} parent=1 // pred_check
      _
    $region3: #{tpu_custom_call.1} parent=1 // pred_check_branch
      %17 = sbr.rel (0) target = $region5
    $region4: #{tpu_custom_call.1} parent=1 // pred_region
      %s19 = ssub.s32 128, 128
      %20 = vsyncadd [#allocation3], %s19
      %s21 = sshll.u32 [#allocation2], 4
      %s22 = int_to_ptr.vmem [resolvable:$true] %s21
      %27 = dma.hbm_to_vmem [thread:$0]  %s0, 128, %s22, [#allocation3], 64, 64, 4
    $region5: #{tpu_custom_call.1} parent=1 // pred_fallthru
      _
    // Predicated region
    $region6: #{tpu_custom_call.1} parent=1 // pred_check
      _
    $region7: #{tpu_custom_call.1} parent=1 // pred_check_branch
      %29 = sbr.rel (0) target = $region9
    $region8: #{tpu_custom_call.1} parent=1 // pred_region
      %s31 = ssub.s32 256, 256
      %32 = vsyncadd [#allocation6], %s31
      %s33 = sshll.u32 [#allocation5], 4
      %s34 = int_to_ptr.vmem [resolvable:$true] %s33
      %39 = dma.hbm_to_vmem [thread:$0]  %s1, 256, %s34, [#allocation6], 64, 64, 4
    $region9: #{tpu_custom_call.1} parent=1 // pred_fallthru
      _
    // Predicated region
    $region10: #{tpu_custom_call.1} parent=1 // pred_check
      _
    $region11: #{tpu_custom_call.1} parent=1 // pred_check_branch
      %41 = sbr.rel (0) target = $region13
    $region12: #{tpu_custom_call.1} parent=1 // pred_region
      _
    $region13: #{tpu_custom_call.1} parent=1 // pred_fallthru
      _
    // Predicated region
    $region14: #{tpu_custom_call.1} parent=1 // pred_check
      _
    $region15: #{tpu_custom_call.1} parent=1 // pred_check_branch
      %43 = sbr.rel (0) target = $region17
    $region16: #{tpu_custom_call.1} parent=1 // pred_region
      %s45 = ssub.s32 2048, 2048
      %46 = vsyncadd [#allocation6], %s45
      %s47 = sshll.u32 [#allocation7], 4
      %s48 = int_to_ptr.vmem [resolvable:$true] %s47
      %53 = dma.hbm_to_vmem [thread:$0]  %s3, 2048, %s48, [#allocation6], 128, 128, 8
    $region17: #{tpu_custom_call.1} parent=1 // pred_fallthru
      _
    // Predicated region
    $region18: #{tpu_custom_call.1} parent=1 // pred_check
      _
    $region19: #{tpu_custom_call.1} parent=1 // pred_check_branch
      %55 = sbr.rel (0) target = $region21
    $region20: #{tpu_custom_call.1} parent=1 // pred_region
      %s57 = ssub.s32 2048, 2048
      %58 = vsyncadd [#allocation9], %s57
      %s59 = sshll.u32 [#allocation8], 4
      %s60 = int_to_ptr.vmem [resolvable:$true] %s59
      %65 = dma.hbm_to_vmem [thread:$0]  %s4, 2048, %s60, [#allocation9], 128, 128, 8
    $region21: #{tpu_custom_call.1} parent=1 // pred_fallthru
      _
    // Predicated region
    $region22: #{tpu_custom_call.1} parent=1 // pred_check
      _
    $region23: #{tpu_custom_call.1} parent=1 // pred_check_branch
      %67 = sbr.rel (0) target = $region25
    $region24: #{tpu_custom_call.1} parent=1 // pred_region
      _
    $region25: #{tpu_custom_call.1} parent=1 // pred_fallthru
      _
    // Predicated region
    $region26: #{tpu_custom_call.1} parent=1 // pred_check
      _
    $region27: #{tpu_custom_call.1} parent=1 // pred_check_branch
      %69 = sbr.rel (0) target = $region29
    $region28: #{tpu_custom_call.1} parent=1 // pred_region
      _
    $region29: #{tpu_custom_call.1} parent=1 // pred_fallthru
      _
    // Predicated region
    $region30: #{tpu_custom_call.1} parent=1 // pred_check
      _
    $region31: #{tpu_custom_call.1} parent=1 // pred_check_branch
      %71 = sbr.rel (0) target = $region33
    $region32: #{tpu_custom_call.1} parent=1 // pred_region
      %72 = dma.done [#allocation3], 128
    $region33: #{tpu_custom_call.1} parent=1 // pred_fallthru
      _
    // Predicated region
    $region34: #{tpu_custom_call.1} parent=1 // pred_check
      _
    $region35: #{tpu_custom_call.1} parent=1 // pred_check_branch
      %74 = sbr.rel (0) target = $region37
    $region36: #{tpu_custom_call.1} parent=1 // pred_region
      %75 = dma.done [#allocation6], 256
    $region37: #{tpu_custom_call.1} parent=1 // pred_fallthru
      _
    // Predicated region
    $region38: #{tpu_custom_call.1} parent=1 // pred_check
      _
    $region39: #{tpu_custom_call.1} parent=1 // pred_check_branch
      %77 = sbr.rel (0) target = $region41
    $region40: #{tpu_custom_call.1} parent=1 // pred_region
      %78 = dma.done [#allocation6], 2048
    $region41: #{tpu_custom_call.1} parent=1 // pred_fallthru
      _
    // Predicated region
    $region42: #{tpu_custom_call.1} parent=1 // pred_check
      _
    $region43: #{tpu_custom_call.1} parent=1 // pred_check_branch
      %80 = sbr.rel (0) target = $region45
    $region44: #{tpu_custom_call.1} parent=1 // pred_region
      %81 = dma.done [#allocation9], 2048
    $region45: #{tpu_custom_call.1} parent=1 // pred_fallthru
      _
    %v83 = vld [vmem:[#allocation2] sm:$0xf]
    %v84 = vld [vmem:[#allocation2 + $0x4] sm:$0xf]
    %v85 = vld [vmem:[#allocation5] sm:$0xf]
    %v86 = vld [vmem:[#allocation5 + $0x4] sm:$0xf]
    %v87 = vld [vmem:[#allocation5 + $0x8] sm:$0xf]
    %v88 = vld [vmem:[#allocation5 + $0xc] sm:$0xf]
    %v89 = vld [vmem:[%s2] sm:$0x1]
    %v91 = vlaneseq
    %v92 = vshrl.u32 %v91, 7
    %v93 = vsub.s32 0, %v92
    %v94 = vrot.slane %v89, %v93
    %v98 = vunpack.c.l.b16 %v83
    %v99 = vunpack.c.l.b16 %v84
    %v100 = vpack.c.b16 %v99, %v98
    %v105 = vunpack.c.l.b16 %v85
    %v106 = vunpack.c.l.b16 %v86
    %v107 = vunpack.c.l.b16 %v87
    %v108 = vunpack.c.l.b16 %v88
    %v109 = vpack.c.b16 %v106, %v105
    %v110 = vpack.c.b16 %v108, %v107
    %vm113 = vcmask 261120
    %v115 = vsel %vm113, %v100, 0
    %117 = vmatprep.subr.bf16.mxu0 0
    %118 = vmatpush1.bf16.msra.mxu0 0
    %119 = vmatprep.subr.bf16.mxu0 0
    %120 = vmatpush1.bf16.msra.mxu0 0
    %121 = vmatprep.subr.bf16.mxu0 0
    %122 = vmatpush1.bf16.msra.mxu0 0
    %123 = vmatprep.subr.bf16.mxu0 0
    %124 = vmatpush1.bf16.msra.mxu0 0
    %125 = vmatprep.subr.bf16.mxu0 0
    %126 = vmatpush1.bf16.msra.mxu0 0
    %127 = vmatprep.subr.bf16.mxu0 0
    %128 = vmatpush1.bf16.msra.mxu0 0
    %129 = vmatprep.subr.bf16.mxu0 0
    %130 = vmatpush1.bf16.msra.mxu0 %v110
    %131 = vmatprep.subr.bf16.mxu0 0
    %132 = vmatpush1.bf16.msra.mxu0 %v109
    %133 = vmatprep.subr.bf16.mxu0 0
    %134 = vmatpush2.bf16.msra.mxu0 0
    %135 = vmatprep.subr.bf16.mxu0 0
    %136 = vmatpush2.bf16.msra.mxu0 0
    %137 = vmatprep.subr.bf16.mxu0 0
    %138 = vmatpush2.bf16.msra.mxu0 0
    %139 = vmatprep.subr.bf16.mxu0 0
    %140 = vmatpush2.bf16.msra.mxu0 0
    %141 = vmatprep.subr.bf16.mxu0 0
    %142 = vmatpush2.bf16.msra.mxu0 0
    %143 = vmatprep.subr.bf16.mxu0 0
    %144 = vmatpush2.bf16.msra.mxu0 0
    %145 = vmatprep.subr.bf16.mxu0 0
    %146 = vmatpush2.bf16.msra.mxu0 0
    %147 = vmatprep.subr.bf16.mxu0 0
    %148 = vmatpush2.bf16.msra.mxu0 0
    %149 = vmatprep.mubr.bf16.mxu0 0
    %150 = vmatmul.mubr.bf16.gmra.mxu0 %v115
    %v151 = vpop.f32.mrf.mxu0
    %v152 = vadd.f32 %v94, %v151
    %v153 = vpop.f32.mrf.mxu0
    %v154 = vpop.f32.mrf.mxu0
    %v155 = vadd.f32 %v94, %v154
    %v156 = vpop.f32.mrf.mxu0
    %157 = vdwg.mxu0
    %v158 = vmul.f32 %v152, %v152
    %v159 = vmul.f32 %v155, %v155
    %v160 = vld [vmem:[#allocation7] sm:$0xff]
    %v161 = vld [vmem:[#allocation7 + $0x8] sm:$0xff]
    %v162 = vld [vmem:[#allocation7 + $0x10] sm:$0xff]
    %v163 = vld [vmem:[#allocation7 + $0x18] sm:$0xff]
    %v164 = vld [vmem:[#allocation7 + $0x20] sm:$0xff]
    %v165 = vld [vmem:[#allocation7 + $0x28] sm:$0xff]
    %v166 = vld [vmem:[#allocation7 + $0x30] sm:$0xff]
    %v167 = vld [vmem:[#allocation7 + $0x38] sm:$0xff]
    %v168 = vld [vmem:[#allocation7 + $0x40] sm:$0xff]
    %v169 = vld [vmem:[#allocation7 + $0x48] sm:$0xff]
    %v170 = vld [vmem:[#allocation7 + $0x50] sm:$0xff]
    %v171 = vld [vmem:[#allocation7 + $0x58] sm:$0xff]
    %v172 = vld [vmem:[#allocation7 + $0x60] sm:$0xff]
    %v173 = vld [vmem:[#allocation7 + $0x68] sm:$0xff]
    %v174 = vld [vmem:[#allocation7 + $0x70] sm:$0xff]
    %v175 = vld [vmem:[#allocation7 + $0x78] sm:$0xff]
    %176 = vmatprep.subr.mxu0 0.0
    %177 = vmatpush1.msra.mxu0 %v175
    %178 = vmatprep.subr.mxu0 0.0
    %179 = vmatpush1.msra.mxu0 %v174
    %180 = vmatprep.subr.mxu0 0.0
    %181 = vmatpush1.msra.mxu0 %v173
    %182 = vmatprep.subr.mxu0 0.0
    %183 = vmatpush1.msra.mxu0 %v172
    %184 = vmatprep.subr.mxu0 0.0
    %185 = vmatpush1.msra.mxu0 %v171
    %186 = vmatprep.subr.mxu0 0.0
    %187 = vmatpush1.msra.mxu0 %v170
    %188 = vmatprep.subr.mxu0 0.0
    %189 = vmatpush1.msra.mxu0 %v169
    %190 = vmatprep.subr.mxu0 0.0
    %191 = vmatpush1.msra.mxu0 %v168
    %192 = vmatprep.subr.mxu0 0.0
    %193 = vmatpush1.msra.mxu0 %v167
    %194 = vmatprep.subr.mxu0 0.0
    %195 = vmatpush1.msra.mxu0 %v166
    %196 = vmatprep.subr.mxu0 0.0
    %197 = vmatpush1.msra.mxu0 %v165
    %198 = vmatprep.subr.mxu0 0.0
    %199 = vmatpush1.msra.mxu0 %v164
    %200 = vmatprep.subr.mxu0 0.0
    %201 = vmatpush1.msra.mxu0 %v163
    %202 = vmatprep.subr.mxu0 0.0
    %203 = vmatpush1.msra.mxu0 %v162
    %204 = vmatprep.subr.mxu0 0.0
    %205 = vmatpush1.msra.mxu0 %v161
    %206 = vmatprep.subr.mxu0 0.0
    %207 = vmatpush1.msra.mxu0 %v160
    %208 = vmatprep.subr.mxu0 0.0
    %209 = vmatpush2.msra.mxu0 0.0
    %210 = vmatprep.subr.mxu0 0.0
    %211 = vmatpush2.msra.mxu0 0.0
    %212 = vmatprep.subr.mxu0 0.0
    %213 = vmatpush2.msra.mxu0 0.0
    %214 = vmatprep.subr.mxu0 0.0
    %215 = vmatpush2.msra.mxu0 0.0
    %216 = vmatprep.subr.mxu0 0.0
    %217 = vmatpush2.msra.mxu0 0.0
    %218 = vmatprep.subr.mxu0 0.0
    %219 = vmatpush2.msra.mxu0 0.0
    %220 = vmatprep.subr.mxu0 0.0
    %221 = vmatpush2.msra.mxu0 0.0
    %222 = vmatprep.subr.mxu0 0.0
    %223 = vmatpush2.msra.mxu0 0.0
    %224 = vmatprep.subr.mxu0 0.0
    %225 = vmatpush2.msra.mxu0 0.0
    %226 = vmatprep.subr.mxu0 0.0
    %227 = vmatpush2.msra.mxu0 0.0
    %228 = vmatprep.subr.mxu0 0.0
    %229 = vmatpush2.msra.mxu0 0.0
    %230 = vmatprep.subr.mxu0 0.0
    %231 = vmatpush2.msra.mxu0 0.0
    %232 = vmatprep.subr.mxu0 0.0
    %233 = vmatpush2.msra.mxu0 0.0
    %234 = vmatprep.subr.mxu0 0.0
    %235 = vmatpush2.msra.mxu0 0.0
    %236 = vmatprep.subr.mxu0 0.0
    %237 = vmatpush2.msra.mxu0 0.0
    %238 = vmatprep.subr.mxu0 0.0
    %239 = vmatpush2.msra.mxu0 0.0
    %240 = vmatprep.mubr.f32.mxu0 0.0
    %241 = vmatmul.mubr.f32.gmra.mxu0 %v158
    %v242 = vpop.f32.mrf.mxu0
    %v243 = vadd.f32 0.0, %v242
    %v244 = vpop.f32.mrf.mxu0
    %245 = vmatprep.mubr.f32.mxu0 0.0
    %246 = vmatmul.mubr.f32.gmra.mxu0 %v159
    %v247 = vpop.f32.mrf.mxu0
    %v248 = vadd.f32 0.0, %v247
    %v249 = vpop.f32.mrf.mxu0
    %250 = vdwg.mxu0
    %v251 = vld [vmem:[#allocation8] sm:$0xff]
    %v252 = vld [vmem:[#allocation8 + $0x8] sm:$0xff]
    %v253 = vld [vmem:[#allocation8 + $0x10] sm:$0xff]
    %v254 = vld [vmem:[#allocation8 + $0x18] sm:$0xff]
    %v255 = vld [vmem:[#allocation8 + $0x20] sm:$0xff]
    %v256 = vld [vmem:[#allocation8 + $0x28] sm:$0xff]
    %v257 = vld [vmem:[#allocation8 + $0x30] sm:$0xff]
    %v258 = vld [vmem:[#allocation8 + $0x38] sm:$0xff]
    %v259 = vld [vmem:[#allocation8 + $0x40] sm:$0xff]
    %v260 = vld [vmem:[#allocation8 + $0x48] sm:$0xff]
    %v261 = vld [vmem:[#allocation8 + $0x50] sm:$0xff]
    %v262 = vld [vmem:[#allocation8 + $0x58] sm:$0xff]
    %v263 = vld [vmem:[#allocation8 + $0x60] sm:$0xff]
    %v264 = vld [vmem:[#allocation8 + $0x68] sm:$0xff]
    %v265 = vld [vmem:[#allocation8 + $0x70] sm:$0xff]
    %v266 = vld [vmem:[#allocation8 + $0x78] sm:$0xff]
    %267 = vmatprep.subr.mxu0 0.0
    %268 = vmatpush1.msra.mxu0 %v266
    %269 = vmatprep.subr.mxu0 0.0
    %270 = vmatpush1.msra.mxu0 %v265
    %271 = vmatprep.subr.mxu0 0.0
    %272 = vmatpush1.msra.mxu0 %v264
    %273 = vmatprep.subr.mxu0 0.0
    %274 = vmatpush1.msra.mxu0 %v263
    %275 = vmatprep.subr.mxu0 0.0
    %276 = vmatpush1.msra.mxu0 %v262
    %277 = vmatprep.subr.mxu0 0.0
    %278 = vmatpush1.msra.mxu0 %v261
    %279 = vmatprep.subr.mxu0 0.0
    %280 = vmatpush1.msra.mxu0 %v260
    %281 = vmatprep.subr.mxu0 0.0
    %282 = vmatpush1.msra.mxu0 %v259
    %283 = vmatprep.subr.mxu0 0.0
    %284 = vmatpush1.msra.mxu0 %v258
    %285 = vmatprep.subr.mxu0 0.0
    %286 = vmatpush1.msra.mxu0 %v257
    %287 = vmatprep.subr.mxu0 0.0
    %288 = vmatpush1.msra.mxu0 %v256
    %289 = vmatprep.subr.mxu0 0.0
    %290 = vmatpush1.msra.mxu0 %v255
    %291 = vmatprep.subr.mxu0 0.0
    %292 = vmatpush1.msra.mxu0 %v254
    %293 = vmatprep.subr.mxu0 0.0
    %294 = vmatpush1.msra.mxu0 %v253
    %295 = vmatprep.subr.mxu0 0.0
    %296 = vmatpush1.msra.mxu0 %v252
    %297 = vmatprep.subr.mxu0 0.0
    %298 = vmatpush1.msra.mxu0 %v251
    %299 = vmatprep.subr.mxu0 0.0
    %300 = vmatpush2.msra.mxu0 0.0
    %301 = vmatprep.subr.mxu0 0.0
    %302 = vmatpush2.msra.mxu0 0.0
    %303 = vmatprep.subr.mxu0 0.0
    %304 = vmatpush2.msra.mxu0 0.0
    %305 = vmatprep.subr.mxu0 0.0
    %306 = vmatpush2.msra.mxu0 0.0
    %307 = vmatprep.subr.mxu0 0.0
    %308 = vmatpush2.msra.mxu0 0.0
    %309 = vmatprep.subr.mxu0 0.0
    %310 = vmatpush2.msra.mxu0 0.0
    %311 = vmatprep.subr.mxu0 0.0
    %312 = vmatpush2.msra.mxu0 0.0
    %313 = vmatprep.subr.mxu0 0.0
    %314 = vmatpush2.msra.mxu0 0.0
    %315 = vmatprep.subr.mxu0 0.0
    %316 = vmatpush2.msra.mxu0 0.0
    %317 = vmatprep.subr.mxu0 0.0
    %318 = vmatpush2.msra.mxu0 0.0
    %319 = vmatprep.subr.mxu0 0.0
    %320 = vmatpush2.msra.mxu0 0.0
    %321 = vmatprep.subr.mxu0 0.0
    %322 = vmatpush2.msra.mxu0 0.0
    %323 = vmatprep.subr.mxu0 0.0
    %324 = vmatpush2.msra.mxu0 0.0
    %325 = vmatprep.subr.mxu0 0.0
    %326 = vmatpush2.msra.mxu0 0.0
    %327 = vmatprep.subr.mxu0 0.0
    %328 = vmatpush2.msra.mxu0 0.0
    %329 = vmatprep.subr.mxu0 0.0
    %330 = vmatpush2.msra.mxu0 0.0
    %331 = vmatprep.mubr.f32.mxu0 0.0
    %332 = vmatmul.mubr.f32.gmra.mxu0 %v243
    %v333 = vpop.f32.mrf.mxu0
    %v334 = vadd.f32 0.0, %v333
    %v335 = vpop.f32.mrf.mxu0
    %336 = vmatprep.mubr.f32.mxu0 0.0
    %337 = vmatmul.mubr.f32.gmra.mxu0 %v248
    %v338 = vpop.f32.mrf.mxu0
    %v339 = vadd.f32 0.0, %v338
    %v340 = vpop.f32.mrf.mxu0
    %341 = vdwg.mxu0
    %v342 = vrsqrt.pop %v334
    %v343 = vmul.f32 %v334, %v342
    %vm344 = vcmp.eq.f32.partialorder %v334, inf
    %v345 = vsel %vm344, %v334, %v343
    %vm346 = vcmp.eq.f32.partialorder %v334, 0.0
    %v347 = vand.u32 %v334, 2147483648
    %v348 = vsel %vm346, %v347, %v345
    %v349 = vrsqrt.pop %v339
    %v350 = vmul.f32 %v339, %v349
    %vm351 = vcmp.eq.f32.partialorder %v339, inf
    %v352 = vsel %vm351, %v339, %v350
    %vm353 = vcmp.eq.f32.partialorder %v339, 0.0
    %v354 = vand.u32 %v339, 2147483648
    %v355 = vsel %vm353, %v354, %v352
    %v356 = vld [vmem:[%s5] sm:$0x1]
    %v358 = vlaneseq
    %v359 = vshrl.u32 %v358, 7
    %v360 = vsub.s32 0, %v359
    %v361 = vrot.slane %v356, %v360
    %v363 = vadd.f32 %v348, %v361
    %v364 = vadd.f32 %v355, %v361
    %v365 = vld [vmem:[%s6] sm:$0x1]
    %vm366 = vcmp.gt.f32.partialorder %v365, 0.5
    %v367 = vrcp.pop %v363
    %v368 = vrcp.pop %v364
    %v369 = vsel %vm366, 1, 0
    %v370 = vlaneseq
    %v371 = vshrl.u32 %v370, 7
    %v372 = vsub.s32 0, %v371
    %v373 = vrot.slane %v369, %v372
    %vm374 = vcmp.eq.s32.totalorder %v373, 1
    %v375 = vsel %vm374, 1.0, %v367
    %v376 = vsel %vm374, 1.0, %v368
    %v377 = vmul.f32 %v152, %v375
    %v378 = vmul.f32 %v155, %v376
    %379 = vst [vmem:[#allocation10] sm:$0xff] %v377
    %380 = vst [vmem:[#allocation10 + $0x8] sm:$0xff] %v378
    // Predicated region
    $region46: #{tpu_custom_call.1} parent=1 // pred_check
      _
    $region47: #{tpu_custom_call.1} parent=1 // pred_check_branch
      %382 = sbr.rel (0) target = $region49
    $region48: #{tpu_custom_call.1} parent=1 // pred_region
      %s384 = ssub.s32 256, 256
      %385 = vsyncadd [#allocation4], %s384
      %s386 = sshll.u32 [#allocation10], 4
      %s387 = int_to_ptr.vmem [resolvable:$true] %s386
      %392 = dma.vmem_to_hbm [thread:$0]  %s387, 256, %s7, [#allocation4], 128, 128, 8
    $region49: #{tpu_custom_call.1} parent=1 // pred_fallthru
      _
    // Predicated region
    $region50: #{tpu_custom_call.1} parent=1 // pred_check
      _
    $region51: #{tpu_custom_call.1} parent=1 // pred_check_branch
      %394 = sbr.rel (0) target = $region53
    $region52: #{tpu_custom_call.1} parent=1 // pred_region
      %395 = dma.done [#allocation4], 256
    $region53: #{tpu_custom_call.1} parent=1 // pred_fallthru
      _
    %396 = vsyncpa [#allocation3], 1
    %397 = vsyncpa [#allocation6], 1
    %398 = vsyncpa [#allocation9], 1
    %399 = vsyncpa [#allocation4], 1

// kernel: tpu_custom_call.1
$region0: #{tpu_custom_call.1}
  #allocation0 [shape = 'u32[]', space=smem, size = 0x4, offset = 0x4, fixed_abs, tag = 'smem constant byte address 0x4 - core index']
  #allocation1 [shape = 'u32[144,128]{1,0:T(1,128)}', space=vmem, size = 0x12000, scoped, tag = 'internal scratch']
  %s0 = inlined_call_operand.hbm [shape: bf16[16,32], index: 0, kind: input, shape index: {}]
  %s1 = inlined_call_operand.hbm [shape: bf16[32,128], index: 1, kind: input, shape index: {}]
  %s2 = inlined_call_operand.vmem [shape: f32[1,128], index: 2, kind: input, shape index: {}]
  %s3 = inlined_call_operand.hbm [shape: f32[128,128], index: 3, kind: input, shape index: {}]
  %s4 = inlined_call_operand.hbm [shape: f32[128,128], index: 4, kind: input, shape index: {}]
  %s5 = inlined_call_operand.vmem [shape: f32[1,128], index: 5, kind: input, shape index: {}]
  %s6 = inlined_call_operand.vmem [shape: f32[1,128], index: 6, kind: input, shape index: {}]
  %s7 = inlined_call_operand.hbm [shape: f32[16,128], index: 7, kind: output, shape index: {}]
  %s8 = sld [smem:[#allocation0]]
  $region54: #{tpu_custom_call.1} parent=0
    _
  %s10 = ssub.s32 1, %s8
  %s11 = scalar_select 0, %s10, %s8
  $region1: #{tpu_custom_call.1} parent=0
    #allocation2 [shape = 'u8[4096]{0}', space=vmem, size = 0x1000, scoped, tag = 'input window, operand 0, single buffered']
    #allocation3 [shape = 's32[1]{0}', space=sflag, size = 0x4, scoped, tag = 'scoped memory for tpu_custom_call.1']
    #allocation4 [shape = 's32[1]{0}', space=sflag, size = 0x4, scoped, tag = 'scoped memory for tpu_custom_call.1']
    #allocation5 [shape = 'u8[8192]{0}', space=vmem, size = 0x2000, scoped, tag = 'input window, operand 1, single buffered']
    #allocation6 [shape = 's32[1]{0}', space=sflag, size = 0x4, scoped, tag = 'scoped memory for tpu_custom_call.1']
    #allocation7 [shape = 'u8[65536]{0}', space=vmem, size = 0x10000, scoped, tag = 'input window, operand 3, single buffered']
    #allocation8 [shape = 'u8[65536]{0}', space=vmem, size = 0x10000, scoped, tag = 'input window, operand 4, single buffered']
    #allocation9 [shape = 's32[1]{0}', space=sflag, size = 0x4, scoped, tag = 'scoped memory for tpu_custom_call.1']
    #allocation10 [shape = 'u8[8192]{0}', space=vmem, size = 0x2000, scoped, tag = 'output window, operand 0, single buffered']
    %12 = vsyncpa [#allocation3], 0
    %13 = vsyncpa [#allocation6], 0
    %14 = vsyncpa [#allocation9], 0
    %15 = vsyncpa [#allocation4], 0
    // Predicated region
    $region2: #{tpu_custom_call.1} parent=1 // pred_check
      _
    $region3: #{tpu_custom_call.1} parent=1 // pred_check_branch
      %17 = sbr.rel (0) target = $region5
    $region4: #{tpu_custom_call.1} parent=1 // pred_region
      %s19 = ssub.s32 128, 128
      %20 = vsyncadd [#allocation3], %s19
      %s21 = sshll.u32 [#allocation2], 4
      %s22 = int_to_ptr.vmem [resolvable:$true] %s21
      %27 = dma.hbm_to_vmem [thread:$0]  %s0, 128, %s22, [#allocation3], 64, 64, 4
    $region5: #{tpu_custom_call.1} parent=1 // pred_fallthru
      _
    // Predicated region
    $region6: #{tpu_custom_call.1} parent=1 // pred_check
      _
    $region7: #{tpu_custom_call.1} parent=1 // pred_check_branch
      %29 = sbr.rel (0) target = $region9
    $region8: #{tpu_custom_call.1} parent=1 // pred_region
      %s31 = ssub.s32 256, 256
      %32 = vsyncadd [#allocation6], %s31
      %s33 = sshll.u32 [#allocation5], 4
      %s34 = int_to_ptr.vmem [resolvable:$true] %s33
      %39 = dma.hbm_to_vmem [thread:$0]  %s1, 256, %s34, [#allocation6], 64, 64, 4
    $region9: #{tpu_custom_call.1} parent=1 // pred_fallthru
      _
    // Predicated region
    $region10: #{tpu_custom_call.1} parent=1 // pred_check
      _
    $region11: #{tpu_custom_call.1} parent=1 // pred_check_branch
      %41 = sbr.rel (0) target = $region13
    $region12: #{tpu_custom_call.1} parent=1 // pred_region
      _
    $region13: #{tpu_custom_call.1} parent=1 // pred_fallthru
      _
    // Predicated region
    $region14: #{tpu_custom_call.1} parent=1 // pred_check
      _
    $region15: #{tpu_custom_call.1} parent=1 // pred_check_branch
      %43 = sbr.rel (0) target = $region17
    $region16: #{tpu_custom_call.1} parent=1 // pred_region
      %s45 = ssub.s32 2048, 2048
      %46 = vsyncadd [#allocation6], %s45
      %s47 = sshll.u32 [#allocation7], 4
      %s48 = int_to_ptr.vmem [resolvable:$true] %s47
      %53 = dma.hbm_to_vmem [thread:$0]  %s3, 2048, %s48, [#allocation6], 128, 128, 8
    $region17: #{tpu_custom_call.1} parent=1 // pred_fallthru
      _
    // Predicated region
    $region18: #{tpu_custom_call.1} parent=1 // pred_check
      _
    $region19: #{tpu_custom_call.1} parent=1 // pred_check_branch
      %55 = sbr.rel (0) target = $region21
    $region20: #{tpu_custom_call.1} parent=1 // pred_region
      %s57 = ssub.s32 2048, 2048
      %58 = vsyncadd [#allocation9], %s57
      %s59 = sshll.u32 [#allocation8], 4
      %s60 = int_to_ptr.vmem [resolvable:$true] %s59
      %65 = dma.hbm_to_vmem [thread:$0]  %s4, 2048, %s60, [#allocation9], 128, 128, 8
    $region21: #{tpu_custom_call.1} parent=1 // pred_fallthru
      _
    // Predicated region
    $region22: #{tpu_custom_call.1} parent=1 // pred_check
      _
    $region23: #{tpu_custom_call.1} parent=1 // pred_check_branch
      %67 = sbr.rel (0) target = $region25
    $region24: #{tpu_custom_call.1} parent=1 // pred_region
      _
    $region25: #{tpu_custom_call.1} parent=1 // pred_fallthru
      _
    // Predicated region
    $region26: #{tpu_custom_call.1} parent=1 // pred_check
      _
    $region27: #{tpu_custom_call.1} parent=1 // pred_check_branch
      %69 = sbr.rel (0) target = $region29
    $region28: #{tpu_custom_call.1} parent=1 // pred_region
      _
    $region29: #{tpu_custom_call.1} parent=1 // pred_fallthru
      _
    // Predicated region
    $region30: #{tpu_custom_call.1} parent=1 // pred_check
      _
    $region31: #{tpu_custom_call.1} parent=1 // pred_check_branch
      %71 = sbr.rel (0) target = $region33
    $region32: #{tpu_custom_call.1} parent=1 // pred_region
      %72 = dma.done [#allocation3], 128
    $region33: #{tpu_custom_call.1} parent=1 // pred_fallthru
      _
    // Predicated region
    $region34: #{tpu_custom_call.1} parent=1 // pred_check
      _
    $region35: #{tpu_custom_call.1} parent=1 // pred_check_branch
      %74 = sbr.rel (0) target = $region37
    $region36: #{tpu_custom_call.1} parent=1 // pred_region
      %75 = dma.done [#allocation6], 256
    $region37: #{tpu_custom_call.1} parent=1 // pred_fallthru
      _
    // Predicated region
    $region38: #{tpu_custom_call.1} parent=1 // pred_check
      _
    $region39: #{tpu_custom_call.1} parent=1 // pred_check_branch
      %77 = sbr.rel (0) target = $region41
    $region40: #{tpu_custom_call.1} parent=1 // pred_region
      %78 = dma.done [#allocation6], 2048
    $region41: #{tpu_custom_call.1} parent=1 // pred_fallthru
      _
    // Predicated region
    $region42: #{tpu_custom_call.1} parent=1 // pred_check
      _
    $region43: #{tpu_custom_call.1} parent=1 // pred_check_branch
      %80 = sbr.rel (0) target = $region45
    $region44: #{tpu_custom_call.1} parent=1 // pred_region
      %81 = dma.done [#allocation9], 2048
    $region45: #{tpu_custom_call.1} parent=1 // pred_fallthru
      _
    %v83 = vld [vmem:[#allocation2] sm:$0xf]
    %v84 = vld [vmem:[#allocation2 + $0x4] sm:$0xf]
    %v85 = vld [vmem:[#allocation5] sm:$0xf]
    %v86 = vld [vmem:[#allocation5 + $0x4] sm:$0xf]
    %v87 = vld [vmem:[#allocation5 + $0x8] sm:$0xf]
    %v88 = vld [vmem:[#allocation5 + $0xc] sm:$0xf]
    %v89 = vld [vmem:[%s2] sm:$0x1]
    %v91 = vlaneseq
    %v92 = vshrl.u32 %v91, 7
    %v93 = vsub.s32 0, %v92
    %v94 = vrot.slane %v89, %v93
    %v98 = vunpack.c.l.b16 %v83
    %v99 = vunpack.c.l.b16 %v84
    %v100 = vpack.c.b16 %v99, %v98
    %v105 = vunpack.c.l.b16 %v85
    %v106 = vunpack.c.l.b16 %v86
    %v107 = vunpack.c.l.b16 %v87
    %v108 = vunpack.c.l.b16 %v88
    %v109 = vpack.c.b16 %v106, %v105
    %v110 = vpack.c.b16 %v108, %v107
    %vm113 = vcmask 261120
    %v115 = vsel %vm113, %v100, 0
    %117 = vmatprep.subr.bf16.mxu0 0
    %118 = vmatpush1.bf16.msra.mxu0 0
    %119 = vmatprep.subr.bf16.mxu0 0
    %120 = vmatpush1.bf16.msra.mxu0 0
    %121 = vmatprep.subr.bf16.mxu0 0
    %122 = vmatpush1.bf16.msra.mxu0 0
    %123 = vmatprep.subr.bf16.mxu0 0
    %124 = vmatpush1.bf16.msra.mxu0 0
    %125 = vmatprep.subr.bf16.mxu0 0
    %126 = vmatpush1.bf16.msra.mxu0 0
    %127 = vmatprep.subr.bf16.mxu0 0
    %128 = vmatpush1.bf16.msra.mxu0 0
    %129 = vmatprep.subr.bf16.mxu0 0
    %130 = vmatpush1.bf16.msra.mxu0 %v110
    %131 = vmatprep.subr.bf16.mxu0 0
    %132 = vmatpush1.bf16.msra.mxu0 %v109
    %133 = vmatprep.subr.bf16.mxu0 0
    %134 = vmatpush2.bf16.msra.mxu0 0
    %135 = vmatprep.subr.bf16.mxu0 0
    %136 = vmatpush2.bf16.msra.mxu0 0
    %137 = vmatprep.subr.bf16.mxu0 0
    %138 = vmatpush2.bf16.msra.mxu0 0
    %139 = vmatprep.subr.bf16.mxu0 0
    %140 = vmatpush2.bf16.msra.mxu0 0
    %141 = vmatprep.subr.bf16.mxu0 0
    %142 = vmatpush2.bf16.msra.mxu0 0
    %143 = vmatprep.subr.bf16.mxu0 0
    %144 = vmatpush2.bf16.msra.mxu0 0
    %145 = vmatprep.subr.bf16.mxu0 0
    %146 = vmatpush2.bf16.msra.mxu0 0
    %147 = vmatprep.subr.bf16.mxu0 0
    %148 = vmatpush2.bf16.msra.mxu0 0
    %149 = vmatprep.mubr.bf16.mxu0 0
    %150 = vmatmul.mubr.bf16.gmra.mxu0 %v115
    %v151 = vpop.f32.mrf.mxu0
    %v152 = vadd.f32 %v94, %v151
    %v153 = vpop.f32.mrf.mxu0
    %v154 = vpop.f32.mrf.mxu0
    %v155 = vadd.f32 %v94, %v154
    %v156 = vpop.f32.mrf.mxu0
    %157 = vdwg.mxu0
    %v158 = vmul.f32 %v152, %v152
    %v159 = vmul.f32 %v155, %v155
    %v160 = vld [vmem:[#allocation7] sm:$0xff]
    %v161 = vld [vmem:[#allocation7 + $0x8] sm:$0xff]
    %v162 = vld [vmem:[#allocation7 + $0x10] sm:$0xff]
    %v163 = vld [vmem:[#allocation7 + $0x18] sm:$0xff]
    %v164 = vld [vmem:[#allocation7 + $0x20] sm:$0xff]
    %v165 = vld [vmem:[#allocation7 + $0x28] sm:$0xff]
    %v166 = vld [vmem:[#allocation7 + $0x30] sm:$0xff]
    %v167 = vld [vmem:[#allocation7 + $0x38] sm:$0xff]
    %v168 = vld [vmem:[#allocation7 + $0x40] sm:$0xff]
    %v169 = vld [vmem:[#allocation7 + $0x48] sm:$0xff]
    %v170 = vld [vmem:[#allocation7 + $0x50] sm:$0xff]
    %v171 = vld [vmem:[#allocation7 + $0x58] sm:$0xff]
    %v172 = vld [vmem:[#allocation7 + $0x60] sm:$0xff]
    %v173 = vld [vmem:[#allocation7 + $0x68] sm:$0xff]
    %v174 = vld [vmem:[#allocation7 + $0x70] sm:$0xff]
    %v175 = vld [vmem:[#allocation7 + $0x78] sm:$0xff]
    %176 = vmatprep.subr.mxu0 0.0
    %177 = vmatpush1.msra.mxu0 %v175
    %178 = vmatprep.subr.mxu0 0.0
    %179 = vmatpush1.msra.mxu0 %v174
    %180 = vmatprep.subr.mxu0 0.0
    %181 = vmatpush1.msra.mxu0 %v173
    %182 = vmatprep.subr.mxu0 0.0
    %183 = vmatpush1.msra.mxu0 %v172
    %184 = vmatprep.subr.mxu0 0.0
    %185 = vmatpush1.msra.mxu0 %v171
    %186 = vmatprep.subr.mxu0 0.0
    %187 = vmatpush1.msra.mxu0 %v170
    %188 = vmatprep.subr.mxu0 0.0
    %189 = vmatpush1.msra.mxu0 %v169
    %190 = vmatprep.subr.mxu0 0.0
    %191 = vmatpush1.msra.mxu0 %v168
    %192 = vmatprep.subr.mxu0 0.0
    %193 = vmatpush1.msra.mxu0 %v167
    %194 = vmatprep.subr.mxu0 0.0
    %195 = vmatpush1.msra.mxu0 %v166
    %196 = vmatprep.subr.mxu0 0.0
    %197 = vmatpush1.msra.mxu0 %v165
    %198 = vmatprep.subr.mxu0 0.0
    %199 = vmatpush1.msra.mxu0 %v164
    %200 = vmatprep.subr.mxu0 0.0
    %201 = vmatpush1.msra.mxu0 %v163
    %202 = vmatprep.subr.mxu0 0.0
    %203 = vmatpush1.msra.mxu0 %v162
    %204 = vmatprep.subr.mxu0 0.0
    %205 = vmatpush1.msra.mxu0 %v161
    %206 = vmatprep.subr.mxu0 0.0
    %207 = vmatpush1.msra.mxu0 %v160
    %208 = vmatprep.subr.mxu0 0.0
    %209 = vmatpush2.msra.mxu0 0.0
    %210 = vmatprep.subr.mxu0 0.0
    %211 = vmatpush2.msra.mxu0 0.0
    %212 = vmatprep.subr.mxu0 0.0
    %213 = vmatpush2.msra.mxu0 0.0
    %214 = vmatprep.subr.mxu0 0.0
    %215 = vmatpush2.msra.mxu0 0.0
    %216 = vmatprep.subr.mxu0 0.0
    %217 = vmatpush2.msra.mxu0 0.0
    %218 = vmatprep.subr.mxu0 0.0
    %219 = vmatpush2.msra.mxu0 0.0
    %220 = vmatprep.subr.mxu0 0.0
    %221 = vmatpush2.msra.mxu0 0.0
    %222 = vmatprep.subr.mxu0 0.0
    %223 = vmatpush2.msra.mxu0 0.0
    %224 = vmatprep.subr.mxu0 0.0
    %225 = vmatpush2.msra.mxu0 0.0
    %226 = vmatprep.subr.mxu0 0.0
    %227 = vmatpush2.msra.mxu0 0.0
    %228 = vmatprep.subr.mxu0 0.0
    %229 = vmatpush2.msra.mxu0 0.0
    %230 = vmatprep.subr.mxu0 0.0
    %231 = vmatpush2.msra.mxu0 0.0
    %232 = vmatprep.subr.mxu0 0.0
    %233 = vmatpush2.msra.mxu0 0.0
    %234 = vmatprep.subr.mxu0 0.0
    %235 = vmatpush2.msra.mxu0 0.0
    %236 = vmatprep.subr.mxu0 0.0
    %237 = vmatpush2.msra.mxu0 0.0
    %238 = vmatprep.subr.mxu0 0.0
    %239 = vmatpush2.msra.mxu0 0.0
    %240 = vmatprep.mubr.f32.mxu0 0.0
    %241 = vmatmul.mubr.f32.gmra.mxu0 %v158
    %v242 = vpop.f32.mrf.mxu0
    %v243 = vadd.f32 0.0, %v242
    %v244 = vpop.f32.mrf.mxu0
    %245 = vmatprep.mubr.f32.mxu0 0.0
    %246 = vmatmul.mubr.f32.gmra.mxu0 %v159
    %v247 = vpop.f32.mrf.mxu0
    %v248 = vadd.f32 0.0, %v247
    %v249 = vpop.f32.mrf.mxu0
    %250 = vdwg.mxu0
    %v251 = vld [vmem:[#allocation8] sm:$0xff]
    %v252 = vld [vmem:[#allocation8 + $0x8] sm:$0xff]
    %v253 = vld [vmem:[#allocation8 + $0x10] sm:$0xff]
    %v254 = vld [vmem:[#allocation8 + $0x18] sm:$0xff]
    %v255 = vld [vmem:[#allocation8 + $0x20] sm:$0xff]
    %v256 = vld [vmem:[#allocation8 + $0x28] sm:$0xff]
    %v257 = vld [vmem:[#allocation8 + $0x30] sm:$0xff]
    %v258 = vld [vmem:[#allocation8 + $0x38] sm:$0xff]
    %v259 = vld [vmem:[#allocation8 + $0x40] sm:$0xff]
    %v260 = vld [vmem:[#allocation8 + $0x48] sm:$0xff]
    %v261 = vld [vmem:[#allocation8 + $0x50] sm:$0xff]
    %v262 = vld [vmem:[#allocation8 + $0x58] sm:$0xff]
    %v263 = vld [vmem:[#allocation8 + $0x60] sm:$0xff]
    %v264 = vld [vmem:[#allocation8 + $0x68] sm:$0xff]
    %v265 = vld [vmem:[#allocation8 + $0x70] sm:$0xff]
    %v266 = vld [vmem:[#allocation8 + $0x78] sm:$0xff]
    %267 = vmatprep.subr.mxu0 0.0
    %268 = vmatpush1.msra.mxu0 %v266
    %269 = vmatprep.subr.mxu0 0.0
    %270 = vmatpush1.msra.mxu0 %v265
    %271 = vmatprep.subr.mxu0 0.0
    %272 = vmatpush1.msra.mxu0 %v264
    %273 = vmatprep.subr.mxu0 0.0
    %274 = vmatpush1.msra.mxu0 %v263
    %275 = vmatprep.subr.mxu0 0.0
    %276 = vmatpush1.msra.mxu0 %v262
    %277 = vmatprep.subr.mxu0 0.0
    %278 = vmatpush1.msra.mxu0 %v261
    %279 = vmatprep.subr.mxu0 0.0
    %280 = vmatpush1.msra.mxu0 %v260
    %281 = vmatprep.subr.mxu0 0.0
    %282 = vmatpush1.msra.mxu0 %v259
    %283 = vmatprep.subr.mxu0 0.0
    %284 = vmatpush1.msra.mxu0 %v258
    %285 = vmatprep.subr.mxu0 0.0
    %286 = vmatpush1.msra.mxu0 %v257
    %287 = vmatprep.subr.mxu0 0.0
    %288 = vmatpush1.msra.mxu0 %v256
    %289 = vmatprep.subr.mxu0 0.0
    %290 = vmatpush1.msra.mxu0 %v255
    %291 = vmatprep.subr.mxu0 0.0
    %292 = vmatpush1.msra.mxu0 %v254
    %293 = vmatprep.subr.mxu0 0.0
    %294 = vmatpush1.msra.mxu0 %v253
    %295 = vmatprep.subr.mxu0 0.0
    %296 = vmatpush1.msra.mxu0 %v252
    %297 = vmatprep.subr.mxu0 0.0
    %298 = vmatpush1.msra.mxu0 %v251
    %299 = vmatprep.subr.mxu0 0.0
    %300 = vmatpush2.msra.mxu0 0.0
    %301 = vmatprep.subr.mxu0 0.0
    %302 = vmatpush2.msra.mxu0 0.0
    %303 = vmatprep.subr.mxu0 0.0
    %304 = vmatpush2.msra.mxu0 0.0
    %305 = vmatprep.subr.mxu0 0.0
    %306 = vmatpush2.msra.mxu0 0.0
    %307 = vmatprep.subr.mxu0 0.0
    %308 = vmatpush2.msra.mxu0 0.0
    %309 = vmatprep.subr.mxu0 0.0
    %310 = vmatpush2.msra.mxu0 0.0
    %311 = vmatprep.subr.mxu0 0.0
    %312 = vmatpush2.msra.mxu0 0.0
    %313 = vmatprep.subr.mxu0 0.0
    %314 = vmatpush2.msra.mxu0 0.0
    %315 = vmatprep.subr.mxu0 0.0
    %316 = vmatpush2.msra.mxu0 0.0
    %317 = vmatprep.subr.mxu0 0.0
    %318 = vmatpush2.msra.mxu0 0.0
    %319 = vmatprep.subr.mxu0 0.0
    %320 = vmatpush2.msra.mxu0 0.0
    %321 = vmatprep.subr.mxu0 0.0
    %322 = vmatpush2.msra.mxu0 0.0
    %323 = vmatprep.subr.mxu0 0.0
    %324 = vmatpush2.msra.mxu0 0.0
    %325 = vmatprep.subr.mxu0 0.0
    %326 = vmatpush2.msra.mxu0 0.0
    %327 = vmatprep.subr.mxu0 0.0
    %328 = vmatpush2.msra.mxu0 0.0
    %329 = vmatprep.subr.mxu0 0.0
    %330 = vmatpush2.msra.mxu0 0.0
    %331 = vmatprep.mubr.f32.mxu0 0.0
    %332 = vmatmul.mubr.f32.gmra.mxu0 %v243
    %v333 = vpop.f32.mrf.mxu0
    %v334 = vadd.f32 0.0, %v333
    %v335 = vpop.f32.mrf.mxu0
    %336 = vmatprep.mubr.f32.mxu0 0.0
    %337 = vmatmul.mubr.f32.gmra.mxu0 %v248
    %v338 = vpop.f32.mrf.mxu0
    %v339 = vadd.f32 0.0, %v338
    %v340 = vpop.f32.mrf.mxu0
    %341 = vdwg.mxu0
    %v342 = vrsqrt.pop %v334
    %v343 = vmul.f32 %v334, %v342
    %vm344 = vcmp.eq.f32.partialorder %v334, inf
    %v345 = vsel %vm344, %v334, %v343
    %vm346 = vcmp.eq.f32.partialorder %v334, 0.0
    %v347 = vand.u32 %v334, 2147483648
    %v348 = vsel %vm346, %v347, %v345
    %v349 = vrsqrt.pop %v339
    %v350 = vmul.f32 %v339, %v349
    %vm351 = vcmp.eq.f32.partialorder %v339, inf
    %v352 = vsel %vm351, %v339, %v350
    %vm353 = vcmp.eq.f32.partialorder %v339, 0.0
    %v354 = vand.u32 %v339, 2147483648
    %v355 = vsel %vm353, %v354, %v352
    %v356 = vld [vmem:[%s5] sm:$0x1]
    %v358 = vlaneseq
    %v359 = vshrl.u32 %v358, 7
    %v360 = vsub.s32 0, %v359
    %v361 = vrot.slane %v356, %v360
    %v363 = vadd.f32 %v348, %v361
    %v364 = vadd.f32 %v355, %v361
    %v365 = vld [vmem:[%s6] sm:$0x1]
    %vm366 = vcmp.gt.f32.partialorder %v365, 0.5
    %v367 = vrcp.pop %v363
    %v368 = vrcp.pop %v364
    %v369 = vsel %vm366, 1, 0
    %v370 = vlaneseq
    %v371 = vshrl.u32 %v370, 7
    %v372 = vsub.s32 0, %v371
    %v373 = vrot.slane %v369, %v372
    %vm374 = vcmp.eq.s32.totalorder %v373, 1
    %v375 = vsel %vm374, 1.0, %v367
    %v376 = vsel %vm374, 1.0, %v368
    %v377 = vmul.f32 %v152, %v375
    %v378 = vmul.f32 %v155, %v376
    %379 = vst [vmem:[#allocation10] sm:$0xff] %v377
    %380 = vst [vmem:[#allocation10 + $0x8] sm:$0xff] %v378
    // Predicated region
    $region46: #{tpu_custom_call.1} parent=1 // pred_check
      _
    $region47: #{tpu_custom_call.1} parent=1 // pred_check_branch
      %382 = sbr.rel (0) target = $region49
    $region48: #{tpu_custom_call.1} parent=1 // pred_region
      %s384 = ssub.s32 256, 256
      %385 = vsyncadd [#allocation4], %s384
      %s386 = sshll.u32 [#allocation10], 4
      %s387 = int_to_ptr.vmem [resolvable:$true] %s386
      %392 = dma.vmem_to_hbm [thread:$0]  %s387, 256, %s7, [#allocation4], 128, 128, 8
    $region49: #{tpu_custom_call.1} parent=1 // pred_fallthru
      _
    // Predicated region
    $region50: #{tpu_custom_call.1} parent=1 // pred_check
      _
    $region51: #{tpu_custom_call.1} parent=1 // pred_check_branch
      %394 = sbr.rel (0) target = $region53
    $region52: #{tpu_custom_call.1} parent=1 // pred_region
      %395 = dma.done [#allocation4], 256
    $region53: #{tpu_custom_call.1} parent=1 // pred_fallthru
      _
    %396 = vsyncpa [#allocation3], 1
    %397 = vsyncpa [#allocation6], 1
    %398 = vsyncpa [#allocation9], 1
    %399 = vsyncpa [#allocation4], 1

</llo_original>
